<compile_context>
chip_gen: v7x
topology: tpu7x:2x2x1
jax: 0.10.0
libtpu: 0.0.40
codegen_flags: <defaults>
</compile_context>

<pallas_src>
import math

import jax
import jax.numpy as jnp
import numpy as np
from jax import lax
from jax.experimental import pallas as pl
from jax.experimental.pallas import tpu as pltpu


def setlistnet_kernel(x_ref, w_i_ref, w_h_ref, b_ref, w_d_ref, b_d_ref,
                      out_ref, hs_ref):
    """GRU recurrence + dense head, everything resident in VMEM.

    x_ref   : (L, D)  f32  flattened embeddings per timestep
    w_i_ref : (D, 3H) f32  input->gate weights, columns ordered [r | z | n]
    w_h_ref : (H, 3H) f32  hidden->gate weights, columns ordered [r | z | n]
    b_ref   : (2, 3H) f32  row 0 = b_ih, row 1 = b_hh (gate order [r | z | n])
    w_d_ref : (H, V)  f32  dense weight (transposed)
    b_d_ref : (1, V)  f32  dense bias
    out_ref : (L, V)  f32  logits per timestep
    hs_ref  : (L, H)  f32  VMEM scratch holding the hidden state of every step
    """
    L, _ = x_ref.shape
    H3 = w_h_ref.shape[1]
    H = H3 // 3

    b_i = b_ref[0:1, :]          # (1, 3H)
    b_h = b_ref[1:2, :]          # (1, 3H)

    # Batched input projections for all timesteps: one (L, D) @ (D, 3H) matmul.
    gi_all = jnp.dot(x_ref[...], w_i_ref[...],
                     preferred_element_type=jnp.float32) + b_i       # (L, 3H)

    w_h = w_h_ref[...]           # hoist weight load out of the unrolled loop

    h = jnp.zeros((1, H), jnp.float32)
    # L is static and small -> fully unrolled recurrence (static slices everywhere).
    for t in range(L):
        gi = gi_all[t:t + 1, :]                                       # (1, 3H)
        gh = jnp.dot(h, w_h, preferred_element_type=jnp.float32) + b_h  # (1, 3H)

        # r and z in one fused sigmoid over the first 2H lanes.
        rz = jax.nn.sigmoid(gi[:, :2 * H] + gh[:, :2 * H])            # (1, 2H)
        r = rz[:, :H]
        z = rz[:, H:]
        n = jnp.tanh(gi[:, 2 * H:] + r * gh[:, 2 * H:])               # (1, H)

        h = (1.0 - z) * n + z * h                                     # (1, H)
        hs_ref[t:t + 1, :] = h

    # Dense head batched over all timesteps: one (L, H) @ (H, V) matmul + one store.
    logits = jnp.dot(hs_ref[...], w_d_ref[...],
                     preferred_element_type=jnp.float32) + b_d_ref[...]
    out_ref[...] = logits.astype(out_ref.dtype)


def init_params(key, vocab_size, embedding_dim, sequence_length, hidden_size):
    """Deterministic synthetic parameters, PyTorch layouts (weight_ih: (3H, D), etc.)."""
    D = embedding_dim * sequence_length
    H = hidden_size
    k = 1.0 / math.sqrt(H)
    keys = jax.random.split(key, 7)
    return {
        "embedding": jax.random.normal(keys[0], (vocab_size, embedding_dim), jnp.float32),
        "w_ih": jax.random.uniform(keys[1], (3 * H, D), jnp.float32, -k, k),
        "w_hh": jax.random.uniform(keys[2], (3 * H, H), jnp.float32, -k, k),
        "b_ih": jax.random.uniform(keys[3], (3 * H,), jnp.float32, -k, k),
        "b_hh": jax.random.uniform(keys[4], (3 * H,), jnp.float32, -k, k),
        "w_dense": jax.random.uniform(keys[5], (vocab_size, H), jnp.float32, -k, k),
        "b_dense": jax.random.uniform(keys[6], (vocab_size,), jnp.float32, -k, k),
    }


def setlistnet_forward(inputs, params):
    emb = params["embedding"]
    L, S = inputs.shape
    E = emb.shape[1]
    V, H = params["w_dense"].shape

    # glue: embedding gather + flatten (== x.view(len(inputs), 1, -1) with batch squeezed)
    x = jnp.take(emb, inputs, axis=0).reshape(L, S * E).astype(jnp.float32)

    # Pack weights.  PyTorch stacked gate order in w_ih / w_hh is [r, z, n]; transposing
    # keeps that order along the lane (3H) dimension.
    w_i = params["w_ih"].T                                  # (D, 3H)
    w_h = params["w_hh"].T                                  # (H, 3H)
    b = jnp.stack([params["b_ih"], params["b_hh"]], axis=0)  # (2, 3H)
    w_d = params["w_dense"].T                               # (H, V)
    b_d = params["b_dense"].reshape(1, V)                   # (1, V)

    vmem = pl.BlockSpec(memory_space=pltpu.MemorySpace.VMEM)

    out = pl.pallas_call(
        setlistnet_kernel,
        out_shape=jax.ShapeDtypeStruct((L, V), jnp.float32),
        in_specs=[vmem] * 6,
        out_specs=vmem,
        scratch_shapes=[pltpu.VMEM((L, H), jnp.float32)],
    )(x, w_i, w_h, b, w_d, b_d)

    return out.reshape(L, 1, V)    # (seq, batch=1, vocab), matching torch output


def reference_forward(inputs, params):
    """Pure-JAX reference mirroring torch nn.GRU + nn.Linear semantics."""
    emb = params["embedding"]
    L, _ = inputs.shape
    x = jnp.take(emb, inputs, axis=0).reshape(L, -1)
    w_ih, w_hh = params["w_ih"], params["w_hh"]
    b_ih, b_hh = params["b_ih"], params["b_hh"]
    H = w_hh.shape[1]

    def cell(h, x_t):
        gi = x_t @ w_ih.T + b_ih
        gh = h @ w_hh.T + b_hh
        i_r, i_z, i_n = jnp.split(gi, 3, axis=-1)
        h_r, h_z, h_n = jnp.split(gh, 3, axis=-1)
        r = jax.nn.sigmoid(i_r + h_r)
        z = jax.nn.sigmoid(i_z + h_z)
        n = jnp.tanh(i_n + r * h_n)
        h_new = (1.0 - z) * n + z * h
        return h_new, h_new

    _, hs = lax.scan(cell, jnp.zeros((H,), jnp.float32), x)
    logits = hs @ params["w_dense"].T + params["b_dense"]
    return logits.reshape(L, 1, -1)


if __name__ == "__main__":
    vocab_size = 32
    embedding_dim = 8
    sequence_length = 8
    hidden_size = 32
    L = 8  # len(inputs): number of GRU timesteps

    key = jax.random.PRNGKey(0)
    pkey, ikey = jax.random.split(key)
    params = init_params(pkey, vocab_size, embedding_dim, sequence_length, hidden_size)
    inputs = jax.random.randint(ikey, (L, sequence_length), 0, vocab_size, dtype=jnp.int32)

    out = setlistnet_forward(inputs, params)
    out = jax.block_until_ready(out)

    ref = reference_forward(inputs, params)
    np.testing.assert_allclose(np.asarray(out), np.asarray(ref), rtol=1e-3, atol=1e-3)

    print("KERNEL_OK")
</pallas_src>

<mosaic_0001>
module attributes {stable_mosaic.version = 11 : i64} {
  func.func @setlistnet_kernel(%arg0: memref<8x64xf32, #tpu.memory_space<vmem>>, %arg1: memref<64x96xf32, #tpu.memory_space<vmem>>, %arg2: memref<32x96xf32, #tpu.memory_space<vmem>>, %arg3: memref<2x96xf32, #tpu.memory_space<vmem>>, %arg4: memref<32x32xf32, #tpu.memory_space<vmem>>, %arg5: memref<1x32xf32, #tpu.memory_space<vmem>>, %arg6: memref<8x32xf32, #tpu.memory_space<vmem>>, %arg7: memref<8x32xf32, #tpu.memory_space<vmem>>) attributes {dimension_semantics = [], scalar_prefetch = 0 : i64, scratch_operands = 1 : i64, tpu.core_type = #tpu.core_type<tc>} {
    %c0 = arith.constant 0 : index
    %c0_0 = arith.constant 0 : index
    %0 = vector.load %arg3[%c0, %c0_0] : memref<2x96xf32, #tpu.memory_space<vmem>>, vector<1x96xf32>
    %c1 = arith.constant 1 : index
    %c0_1 = arith.constant 0 : index
    %1 = vector.load %arg3[%c1, %c0_1] : memref<2x96xf32, #tpu.memory_space<vmem>>, vector<1x96xf32>
    %c0_2 = arith.constant 0 : index
    %c0_3 = arith.constant 0 : index
    %2 = vector.load %arg0[%c0_2, %c0_3] : memref<8x64xf32, #tpu.memory_space<vmem>>, vector<8x64xf32>
    %c0_4 = arith.constant 0 : index
    %c0_5 = arith.constant 0 : index
    %3 = vector.load %arg1[%c0_4, %c0_5] : memref<64x96xf32, #tpu.memory_space<vmem>>, vector<64x96xf32>
    %cst = arith.constant dense<0.000000e+00> : vector<8x96xf32>
    %4 = tpu.matmul %2, %3, %cst {dimension_numbers = #tpu.dot_dimension_numbers<[1], [0], [0], [1], [0, 0, 1, 1], [], []>} : vector<8x64xf32>, vector<64x96xf32>, vector<8x96xf32> -> vector<8x96xf32>
    %5 = vector.broadcast %0 : vector<1x96xf32> to vector<8x96xf32>
    %6 = arith.addf %4, %5 : vector<8x96xf32>
    %c0_6 = arith.constant 0 : index
    %c0_7 = arith.constant 0 : index
    %7 = vector.load %arg2[%c0_6, %c0_7] : memref<32x96xf32, #tpu.memory_space<vmem>>, vector<32x96xf32>
    %cst_8 = arith.constant 0.000000e+00 : f32
    %8 = vector.broadcast %cst_8 : f32 to vector<1x32xf32>
    %9 = vector.extract_strided_slice %6 {offsets = [0, 0], sizes = [1, 96], strides = [1, 1]} : vector<8x96xf32> to vector<1x96xf32>
    %cst_9 = arith.constant dense<0.000000e+00> : vector<1x96xf32>
    %10 = tpu.matmul %8, %7, %cst_9 {dimension_numbers = #tpu.dot_dimension_numbers<[1], [0], [0], [1], [0, 0, 1, 1], [], []>} : vector<1x32xf32>, vector<32x96xf32>, vector<1x96xf32> -> vector<1x96xf32>
    %11 = arith.addf %10, %1 : vector<1x96xf32>
    %12 = vector.extract_strided_slice %9 {offsets = [0, 0], sizes = [1, 64], strides = [1, 1]} : vector<1x96xf32> to vector<1x64xf32>
    %13 = vector.extract_strided_slice %11 {offsets = [0, 0], sizes = [1, 64], strides = [1, 1]} : vector<1x96xf32> to vector<1x64xf32>
    %14 = arith.addf %12, %13 : vector<1x64xf32>
    %15 = arith.negf %14 : vector<1x64xf32>
    %16 = math.exp %15 : vector<1x64xf32>
    %cst_10 = arith.constant 1.000000e+00 : f32
    %17 = vector.broadcast %cst_10 : f32 to vector<1x64xf32>
    %18 = arith.addf %17, %16 : vector<1x64xf32>
    %19 = arith.divf %17, %18 : vector<1x64xf32>
    %20 = vector.extract_strided_slice %19 {offsets = [0, 0], sizes = [1, 32], strides = [1, 1]} : vector<1x64xf32> to vector<1x32xf32>
    %21 = vector.extract_strided_slice %19 {offsets = [0, 32], sizes = [1, 32], strides = [1, 1]} : vector<1x64xf32> to vector<1x32xf32>
    %22 = vector.extract_strided_slice %9 {offsets = [0, 64], sizes = [1, 32], strides = [1, 1]} : vector<1x96xf32> to vector<1x32xf32>
    %23 = vector.extract_strided_slice %11 {offsets = [0, 64], sizes = [1, 32], strides = [1, 1]} : vector<1x96xf32> to vector<1x32xf32>
    %24 = arith.mulf %20, %23 : vector<1x32xf32>
    %25 = arith.addf %22, %24 : vector<1x32xf32>
    %26 = math.tanh %25 : vector<1x32xf32>
    %cst_11 = arith.constant 1.000000e+00 : f32
    %27 = vector.broadcast %cst_11 : f32 to vector<1x32xf32>
    %28 = arith.subf %27, %21 : vector<1x32xf32>
    %29 = arith.mulf %28, %26 : vector<1x32xf32>
    %30 = arith.mulf %21, %8 : vector<1x32xf32>
    %31 = arith.addf %29, %30 : vector<1x32xf32>
    %c0_12 = arith.constant 0 : index
    %c0_13 = arith.constant 0 : index
    %32 = vector.load %arg7[%c0_12, %c0_13] : memref<8x32xf32, #tpu.memory_space<vmem>>, vector<1x32xf32>
    tpu.vector_store %arg7[%c0_12, %c0_13], %31 {strides = array<i32>} : memref<8x32xf32, #tpu.memory_space<vmem>>, vector<1x32xf32>,
    %33 = vector.extract_strided_slice %6 {offsets = [1, 0], sizes = [1, 96], strides = [1, 1]} : vector<8x96xf32> to vector<1x96xf32>
    %cst_14 = arith.constant dense<0.000000e+00> : vector<1x96xf32>
    %34 = tpu.matmul %31, %7, %cst_14 {dimension_numbers = #tpu.dot_dimension_numbers<[1], [0], [0], [1], [0, 0, 1, 1], [], []>} : vector<1x32xf32>, vector<32x96xf32>, vector<1x96xf32> -> vector<1x96xf32>
    %35 = arith.addf %34, %1 : vector<1x96xf32>
    %36 = vector.extract_strided_slice %33 {offsets = [0, 0], sizes = [1, 64], strides = [1, 1]} : vector<1x96xf32> to vector<1x64xf32>
    %37 = vector.extract_strided_slice %35 {offsets = [0, 0], sizes = [1, 64], strides = [1, 1]} : vector<1x96xf32> to vector<1x64xf32>
    %38 = arith.addf %36, %37 : vector<1x64xf32>
    %39 = arith.negf %38 : vector<1x64xf32>
    %40 = math.exp %39 : vector<1x64xf32>
    %cst_15 = arith.constant 1.000000e+00 : f32
    %41 = vector.broadcast %cst_15 : f32 to vector<1x64xf32>
    %42 = arith.addf %41, %40 : vector<1x64xf32>
    %43 = arith.divf %41, %42 : vector<1x64xf32>
    %44 = vector.extract_strided_slice %43 {offsets = [0, 0], sizes = [1, 32], strides = [1, 1]} : vector<1x64xf32> to vector<1x32xf32>
    %45 = vector.extract_strided_slice %43 {offsets = [0, 32], sizes = [1, 32], strides = [1, 1]} : vector<1x64xf32> to vector<1x32xf32>
    %46 = vector.extract_strided_slice %33 {offsets = [0, 64], sizes = [1, 32], strides = [1, 1]} : vector<1x96xf32> to vector<1x32xf32>
    %47 = vector.extract_strided_slice %35 {offsets = [0, 64], sizes = [1, 32], strides = [1, 1]} : vector<1x96xf32> to vector<1x32xf32>
    %48 = arith.mulf %44, %47 : vector<1x32xf32>
    %49 = arith.addf %46, %48 : vector<1x32xf32>
    %50 = math.tanh %49 : vector<1x32xf32>
    %cst_16 = arith.constant 1.000000e+00 : f32
    %51 = vector.broadcast %cst_16 : f32 to vector<1x32xf32>
    %52 = arith.subf %51, %45 : vector<1x32xf32>
    %53 = arith.mulf %52, %50 : vector<1x32xf32>
    %54 = arith.mulf %45, %31 : vector<1x32xf32>
    %55 = arith.addf %53, %54 : vector<1x32xf32>
    %c1_17 = arith.constant 1 : index
    %c0_18 = arith.constant 0 : index
    %56 = vector.load %arg7[%c1_17, %c0_18] : memref<8x32xf32, #tpu.memory_space<vmem>>, vector<1x32xf32>
    tpu.vector_store %arg7[%c1_17, %c0_18], %55 {strides = array<i32>} : memref<8x32xf32, #tpu.memory_space<vmem>>, vector<1x32xf32>,
    %57 = vector.extract_strided_slice %6 {offsets = [2, 0], sizes = [1, 96], strides = [1, 1]} : vector<8x96xf32> to vector<1x96xf32>
    %cst_19 = arith.constant dense<0.000000e+00> : vector<1x96xf32>
    %58 = tpu.matmul %55, %7, %cst_19 {dimension_numbers = #tpu.dot_dimension_numbers<[1], [0], [0], [1], [0, 0, 1, 1], [], []>} : vector<1x32xf32>, vector<32x96xf32>, vector<1x96xf32> -> vector<1x96xf32>
    %59 = arith.addf %58, %1 : vector<1x96xf32>
    %60 = vector.extract_strided_slice %57 {offsets = [0, 0], sizes = [1, 64], strides = [1, 1]} : vector<1x96xf32> to vector<1x64xf32>
    %61 = vector.extract_strided_slice %59 {offsets = [0, 0], sizes = [1, 64], strides = [1, 1]} : vector<1x96xf32> to vector<1x64xf32>
    %62 = arith.addf %60, %61 : vector<1x64xf32>
    %63 = arith.negf %62 : vector<1x64xf32>
    %64 = math.exp %63 : vector<1x64xf32>
    %cst_20 = arith.constant 1.000000e+00 : f32
    %65 = vector.broadcast %cst_20 : f32 to vector<1x64xf32>
    %66 = arith.addf %65, %64 : vector<1x64xf32>
    %67 = arith.divf %65, %66 : vector<1x64xf32>
    %68 = vector.extract_strided_slice %67 {offsets = [0, 0], sizes = [1, 32], strides = [1, 1]} : vector<1x64xf32> to vector<1x32xf32>
    %69 = vector.extract_strided_slice %67 {offsets = [0, 32], sizes = [1, 32], strides = [1, 1]} : vector<1x64xf32> to vector<1x32xf32>
    %70 = vector.extract_strided_slice %57 {offsets = [0, 64], sizes = [1, 32], strides = [1, 1]} : vector<1x96xf32> to vector<1x32xf32>
    %71 = vector.extract_strided_slice %59 {offsets = [0, 64], sizes = [1, 32], strides = [1, 1]} : vector<1x96xf32> to vector<1x32xf32>
    %72 = arith.mulf %68, %71 : vector<1x32xf32>
    %73 = arith.addf %70, %72 : vector<1x32xf32>
    %74 = math.tanh %73 : vector<1x32xf32>
    %cst_21 = arith.constant 1.000000e+00 : f32
    %75 = vector.broadcast %cst_21 : f32 to vector<1x32xf32>
    %76 = arith.subf %75, %69 : vector<1x32xf32>
    %77 = arith.mulf %76, %74 : vector<1x32xf32>
    %78 = arith.mulf %69, %55 : vector<1x32xf32>
    %79 = arith.addf %77, %78 : vector<1x32xf32>
    %c2 = arith.constant 2 : index
    %c0_22 = arith.constant 0 : index
    %80 = vector.load %arg7[%c2, %c0_22] : memref<8x32xf32, #tpu.memory_space<vmem>>, vector<1x32xf32>
    tpu.vector_store %arg7[%c2, %c0_22], %79 {strides = array<i32>} : memref<8x32xf32, #tpu.memory_space<vmem>>, vector<1x32xf32>,
    %81 = vector.extract_strided_slice %6 {offsets = [3, 0], sizes = [1, 96], strides = [1, 1]} : vector<8x96xf32> to vector<1x96xf32>
    %cst_23 = arith.constant dense<0.000000e+00> : vector<1x96xf32>
    %82 = tpu.matmul %79, %7, %cst_23 {dimension_numbers = #tpu.dot_dimension_numbers<[1], [0], [0], [1], [0, 0, 1, 1], [], []>} : vector<1x32xf32>, vector<32x96xf32>, vector<1x96xf32> -> vector<1x96xf32>
    %83 = arith.addf %82, %1 : vector<1x96xf32>
    %84 = vector.extract_strided_slice %81 {offsets = [0, 0], sizes = [1, 64], strides = [1, 1]} : vector<1x96xf32> to vector<1x64xf32>
    %85 = vector.extract_strided_slice %83 {offsets = [0, 0], sizes = [1, 64], strides = [1, 1]} : vector<1x96xf32> to vector<1x64xf32>
    %86 = arith.addf %84, %85 : vector<1x64xf32>
    %87 = arith.negf %86 : vector<1x64xf32>
    %88 = math.exp %87 : vector<1x64xf32>
    %cst_24 = arith.constant 1.000000e+00 : f32
    %89 = vector.broadcast %cst_24 : f32 to vector<1x64xf32>
    %90 = arith.addf %89, %88 : vector<1x64xf32>
    %91 = arith.divf %89, %90 : vector<1x64xf32>
    %92 = vector.extract_strided_slice %91 {offsets = [0, 0], sizes = [1, 32], strides = [1, 1]} : vector<1x64xf32> to vector<1x32xf32>
    %93 = vector.extract_strided_slice %91 {offsets = [0, 32], sizes = [1, 32], strides = [1, 1]} : vector<1x64xf32> to vector<1x32xf32>
    %94 = vector.extract_strided_slice %81 {offsets = [0, 64], sizes = [1, 32], strides = [1, 1]} : vector<1x96xf32> to vector<1x32xf32>
    %95 = vector.extract_strided_slice %83 {offsets = [0, 64], sizes = [1, 32], strides = [1, 1]} : vector<1x96xf32> to vector<1x32xf32>
    %96 = arith.mulf %92, %95 : vector<1x32xf32>
    %97 = arith.addf %94, %96 : vector<1x32xf32>
    %98 = math.tanh %97 : vector<1x32xf32>
    %cst_25 = arith.constant 1.000000e+00 : f32
    %99 = vector.broadcast %cst_25 : f32 to vector<1x32xf32>
    %100 = arith.subf %99, %93 : vector<1x32xf32>
    %101 = arith.mulf %100, %98 : vector<1x32xf32>
    %102 = arith.mulf %93, %79 : vector<1x32xf32>
    %103 = arith.addf %101, %102 : vector<1x32xf32>
    %c3 = arith.constant 3 : index
    %c0_26 = arith.constant 0 : index
    %104 = vector.load %arg7[%c3, %c0_26] : memref<8x32xf32, #tpu.memory_space<vmem>>, vector<1x32xf32>
    tpu.vector_store %arg7[%c3, %c0_26], %103 {strides = array<i32>} : memref<8x32xf32, #tpu.memory_space<vmem>>, vector<1x32xf32>,
    %105 = vector.extract_strided_slice %6 {offsets = [4, 0], sizes = [1, 96], strides = [1, 1]} : vector<8x96xf32> to vector<1x96xf32>
    %cst_27 = arith.constant dense<0.000000e+00> : vector<1x96xf32>
    %106 = tpu.matmul %103, %7, %cst_27 {dimension_numbers = #tpu.dot_dimension_numbers<[1], [0], [0], [1], [0, 0, 1, 1], [], []>} : vector<1x32xf32>, vector<32x96xf32>, vector<1x96xf32> -> vector<1x96xf32>
    %107 = arith.addf %106, %1 : vector<1x96xf32>
    %108 = vector.extract_strided_slice %105 {offsets = [0, 0], sizes = [1, 64], strides = [1, 1]} : vector<1x96xf32> to vector<1x64xf32>
    %109 = vector.extract_strided_slice %107 {offsets = [0, 0], sizes = [1, 64], strides = [1, 1]} : vector<1x96xf32> to vector<1x64xf32>
    %110 = arith.addf %108, %109 : vector<1x64xf32>
    %111 = arith.negf %110 : vector<1x64xf32>
    %112 = math.exp %111 : vector<1x64xf32>
    %cst_28 = arith.constant 1.000000e+00 : f32
    %113 = vector.broadcast %cst_28 : f32 to vector<1x64xf32>
    %114 = arith.addf %113, %112 : vector<1x64xf32>
    %115 = arith.divf %113, %114 : vector<1x64xf32>
    %116 = vector.extract_strided_slice %115 {offsets = [0, 0], sizes = [1, 32], strides = [1, 1]} : vector<1x64xf32> to vector<1x32xf32>
    %117 = vector.extract_strided_slice %115 {offsets = [0, 32], sizes = [1, 32], strides = [1, 1]} : vector<1x64xf32> to vector<1x32xf32>
    %118 = vector.extract_strided_slice %105 {offsets = [0, 64], sizes = [1, 32], strides = [1, 1]} : vector<1x96xf32> to vector<1x32xf32>
    %119 = vector.extract_strided_slice %107 {offsets = [0, 64], sizes = [1, 32], strides = [1, 1]} : vector<1x96xf32> to vector<1x32xf32>
    %120 = arith.mulf %116, %119 : vector<1x32xf32>
    %121 = arith.addf %118, %120 : vector<1x32xf32>
    %122 = math.tanh %121 : vector<1x32xf32>
    %cst_29 = arith.constant 1.000000e+00 : f32
    %123 = vector.broadcast %cst_29 : f32 to vector<1x32xf32>
    %124 = arith.subf %123, %117 : vector<1x32xf32>
    %125 = arith.mulf %124, %122 : vector<1x32xf32>
    %126 = arith.mulf %117, %103 : vector<1x32xf32>
    %127 = arith.addf %125, %126 : vector<1x32xf32>
    %c4 = arith.constant 4 : index
    %c0_30 = arith.constant 0 : index
    %128 = vector.load %arg7[%c4, %c0_30] : memref<8x32xf32, #tpu.memory_space<vmem>>, vector<1x32xf32>
    tpu.vector_store %arg7[%c4, %c0_30], %127 {strides = array<i32>} : memref<8x32xf32, #tpu.memory_space<vmem>>, vector<1x32xf32>,
    %129 = vector.extract_strided_slice %6 {offsets = [5, 0], sizes = [1, 96], strides = [1, 1]} : vector<8x96xf32> to vector<1x96xf32>
    %cst_31 = arith.constant dense<0.000000e+00> : vector<1x96xf32>
    %130 = tpu.matmul %127, %7, %cst_31 {dimension_numbers = #tpu.dot_dimension_numbers<[1], [0], [0], [1], [0, 0, 1, 1], [], []>} : vector<1x32xf32>, vector<32x96xf32>, vector<1x96xf32> -> vector<1x96xf32>
    %131 = arith.addf %130, %1 : vector<1x96xf32>
    %132 = vector.extract_strided_slice %129 {offsets = [0, 0], sizes = [1, 64], strides = [1, 1]} : vector<1x96xf32> to vector<1x64xf32>
    %133 = vector.extract_strided_slice %131 {offsets = [0, 0], sizes = [1, 64], strides = [1, 1]} : vector<1x96xf32> to vector<1x64xf32>
    %134 = arith.addf %132, %133 : vector<1x64xf32>
    %135 = arith.negf %134 : vector<1x64xf32>
    %136 = math.exp %135 : vector<1x64xf32>
    %cst_32 = arith.constant 1.000000e+00 : f32
    %137 = vector.broadcast %cst_32 : f32 to vector<1x64xf32>
    %138 = arith.addf %137, %136 : vector<1x64xf32>
    %139 = arith.divf %137, %138 : vector<1x64xf32>
    %140 = vector.extract_strided_slice %139 {offsets = [0, 0], sizes = [1, 32], strides = [1, 1]} : vector<1x64xf32> to vector<1x32xf32>
    %141 = vector.extract_strided_slice %139 {offsets = [0, 32], sizes = [1, 32], strides = [1, 1]} : vector<1x64xf32> to vector<1x32xf32>
    %142 = vector.extract_strided_slice %129 {offsets = [0, 64], sizes = [1, 32], strides = [1, 1]} : vector<1x96xf32> to vector<1x32xf32>
    %143 = vector.extract_strided_slice %131 {offsets = [0, 64], sizes = [1, 32], strides = [1, 1]} : vector<1x96xf32> to vector<1x32xf32>
    %144 = arith.mulf %140, %143 : vector<1x32xf32>
    %145 = arith.addf %142, %144 : vector<1x32xf32>
    %146 = math.tanh %145 : vector<1x32xf32>
    %cst_33 = arith.constant 1.000000e+00 : f32
    %147 = vector.broadcast %cst_33 : f32 to vector<1x32xf32>
    %148 = arith.subf %147, %141 : vector<1x32xf32>
    %149 = arith.mulf %148, %146 : vector<1x32xf32>
    %150 = arith.mulf %141, %127 : vector<1x32xf32>
    %151 = arith.addf %149, %150 : vector<1x32xf32>
    %c5 = arith.constant 5 : index
    %c0_34 = arith.constant 0 : index
    %152 = vector.load %arg7[%c5, %c0_34] : memref<8x32xf32, #tpu.memory_space<vmem>>, vector<1x32xf32>
    tpu.vector_store %arg7[%c5, %c0_34], %151 {strides = array<i32>} : memref<8x32xf32, #tpu.memory_space<vmem>>, vector<1x32xf32>,
    %153 = vector.extract_strided_slice %6 {offsets = [6, 0], sizes = [1, 96], strides = [1, 1]} : vector<8x96xf32> to vector<1x96xf32>
    %cst_35 = arith.constant dense<0.000000e+00> : vector<1x96xf32>
    %154 = tpu.matmul %151, %7, %cst_35 {dimension_numbers = #tpu.dot_dimension_numbers<[1], [0], [0], [1], [0, 0, 1, 1], [], []>} : vector<1x32xf32>, vector<32x96xf32>, vector<1x96xf32> -> vector<1x96xf32>
    %155 = arith.addf %154, %1 : vector<1x96xf32>
    %156 = vector.extract_strided_slice %153 {offsets = [0, 0], sizes = [1, 64], strides = [1, 1]} : vector<1x96xf32> to vector<1x64xf32>
    %157 = vector.extract_strided_slice %155 {offsets = [0, 0], sizes = [1, 64], strides = [1, 1]} : vector<1x96xf32> to vector<1x64xf32>
    %158 = arith.addf %156, %157 : vector<1x64xf32>
    %159 = arith.negf %158 : vector<1x64xf32>
    %160 = math.exp %159 : vector<1x64xf32>
    %cst_36 = arith.constant 1.000000e+00 : f32
    %161 = vector.broadcast %cst_36 : f32 to vector<1x64xf32>
    %162 = arith.addf %161, %160 : vector<1x64xf32>
    %163 = arith.divf %161, %162 : vector<1x64xf32>
    %164 = vector.extract_strided_slice %163 {offsets = [0, 0], sizes = [1, 32], strides = [1, 1]} : vector<1x64xf32> to vector<1x32xf32>
    %165 = vector.extract_strided_slice %163 {offsets = [0, 32], sizes = [1, 32], strides = [1, 1]} : vector<1x64xf32> to vector<1x32xf32>
    %166 = vector.extract_strided_slice %153 {offsets = [0, 64], sizes = [1, 32], strides = [1, 1]} : vector<1x96xf32> to vector<1x32xf32>
    %167 = vector.extract_strided_slice %155 {offsets = [0, 64], sizes = [1, 32], strides = [1, 1]} : vector<1x96xf32> to vector<1x32xf32>
    %168 = arith.mulf %164, %167 : vector<1x32xf32>
    %169 = arith.addf %166, %168 : vector<1x32xf32>
    %170 = math.tanh %169 : vector<1x32xf32>
    %cst_37 = arith.constant 1.000000e+00 : f32
    %171 = vector.broadcast %cst_37 : f32 to vector<1x32xf32>
    %172 = arith.subf %171, %165 : vector<1x32xf32>
    %173 = arith.mulf %172, %170 : vector<1x32xf32>
    %174 = arith.mulf %165, %151 : vector<1x32xf32>
    %175 = arith.addf %173, %174 : vector<1x32xf32>
    %c6 = arith.constant 6 : index
    %c0_38 = arith.constant 0 : index
    %176 = vector.load %arg7[%c6, %c0_38] : memref<8x32xf32, #tpu.memory_space<vmem>>, vector<1x32xf32>
    tpu.vector_store %arg7[%c6, %c0_38], %175 {strides = array<i32>} : memref<8x32xf32, #tpu.memory_space<vmem>>, vector<1x32xf32>,
    %177 = vector.extract_strided_slice %6 {offsets = [7, 0], sizes = [1, 96], strides = [1, 1]} : vector<8x96xf32> to vector<1x96xf32>
    %cst_39 = arith.constant dense<0.000000e+00> : vector<1x96xf32>
    %178 = tpu.matmul %175, %7, %cst_39 {dimension_numbers = #tpu.dot_dimension_numbers<[1], [0], [0], [1], [0, 0, 1, 1], [], []>} : vector<1x32xf32>, vector<32x96xf32>, vector<1x96xf32> -> vector<1x96xf32>
    %179 = arith.addf %178, %1 : vector<1x96xf32>
    %180 = vector.extract_strided_slice %177 {offsets = [0, 0], sizes = [1, 64], strides = [1, 1]} : vector<1x96xf32> to vector<1x64xf32>
    %181 = vector.extract_strided_slice %179 {offsets = [0, 0], sizes = [1, 64], strides = [1, 1]} : vector<1x96xf32> to vector<1x64xf32>
    %182 = arith.addf %180, %181 : vector<1x64xf32>
    %183 = arith.negf %182 : vector<1x64xf32>
    %184 = math.exp %183 : vector<1x64xf32>
    %cst_40 = arith.constant 1.000000e+00 : f32
    %185 = vector.broadcast %cst_40 : f32 to vector<1x64xf32>
    %186 = arith.addf %185, %184 : vector<1x64xf32>
    %187 = arith.divf %185, %186 : vector<1x64xf32>
    %188 = vector.extract_strided_slice %187 {offsets = [0, 0], sizes = [1, 32], strides = [1, 1]} : vector<1x64xf32> to vector<1x32xf32>
    %189 = vector.extract_strided_slice %187 {offsets = [0, 32], sizes = [1, 32], strides = [1, 1]} : vector<1x64xf32> to vector<1x32xf32>
    %190 = vector.extract_strided_slice %177 {offsets = [0, 64], sizes = [1, 32], strides = [1, 1]} : vector<1x96xf32> to vector<1x32xf32>
    %191 = vector.extract_strided_slice %179 {offsets = [0, 64], sizes = [1, 32], strides = [1, 1]} : vector<1x96xf32> to vector<1x32xf32>
    %192 = arith.mulf %188, %191 : vector<1x32xf32>
    %193 = arith.addf %190, %192 : vector<1x32xf32>
    %194 = math.tanh %193 : vector<1x32xf32>
    %cst_41 = arith.constant 1.000000e+00 : f32
    %195 = vector.broadcast %cst_41 : f32 to vector<1x32xf32>
    %196 = arith.subf %195, %189 : vector<1x32xf32>
    %197 = arith.mulf %196, %194 : vector<1x32xf32>
    %198 = arith.mulf %189, %175 : vector<1x32xf32>
    %199 = arith.addf %197, %198 : vector<1x32xf32>
    %c7 = arith.constant 7 : index
    %c0_42 = arith.constant 0 : index
    %200 = vector.load %arg7[%c7, %c0_42] : memref<8x32xf32, #tpu.memory_space<vmem>>, vector<1x32xf32>
    tpu.vector_store %arg7[%c7, %c0_42], %199 {strides = array<i32>} : memref<8x32xf32, #tpu.memory_space<vmem>>, vector<1x32xf32>,
    %c0_43 = arith.constant 0 : index
    %c0_44 = arith.constant 0 : index
    %201 = vector.load %arg7[%c0_43, %c0_44] : memref<8x32xf32, #tpu.memory_space<vmem>>, vector<8x32xf32>
    %c0_45 = arith.constant 0 : index
    %c0_46 = arith.constant 0 : index
    %202 = vector.load %arg4[%c0_45, %c0_46] : memref<32x32xf32, #tpu.memory_space<vmem>>, vector<32x32xf32>
    %cst_47 = arith.constant dense<0.000000e+00> : vector<8x32xf32>
    %203 = tpu.matmul %201, %202, %cst_47 {dimension_numbers = #tpu.dot_dimension_numbers<[1], [0], [0], [1], [0, 0, 1, 1], [], []>} : vector<8x32xf32>, vector<32x32xf32>, vector<8x32xf32> -> vector<8x32xf32>
    %c0_48 = arith.constant 0 : index
    %c0_49 = arith.constant 0 : index
    %204 = vector.load %arg5[%c0_48, %c0_49] : memref<1x32xf32, #tpu.memory_space<vmem>>, vector<1x32xf32>
    %205 = vector.broadcast %204 : vector<1x32xf32> to vector<8x32xf32>
    %206 = arith.addf %203, %205 : vector<8x32xf32>
    %c0_50 = arith.constant 0 : index
    %c0_51 = arith.constant 0 : index
    %207 = vector.load %arg6[%c0_50, %c0_51] : memref<8x32xf32, #tpu.memory_space<vmem>>, vector<8x32xf32>
    tpu.vector_store %arg6[%c0_50, %c0_51], %206 {strides = array<i32>} : memref<8x32xf32, #tpu.memory_space<vmem>>, vector<8x32xf32>,
    return
  }
}

</mosaic_0001>

<llo_original>
// kernel: tpu_custom_call.1
$region0: #{tpu_custom_call.1}
  #allocation0 [shape = 'u32[]', space=smem, size = 0x4, offset = 0x4, fixed_abs, tag = 'smem constant byte address 0x4 - core index']
  #allocation1 [shape = 'u32[144,128]{1,0:T(1,128)}', space=vmem, size = 0x12000, scoped, tag = 'internal scratch']
  #allocation2 [shape = 'f32[8,32]{1,0:T(8,128)}', space=vmem, size = 0x1000, scoped, tag = 'scratch operand']
  %s0 = inlined_call_operand.hbm [shape: f32[8,64], index: 0, kind: input, shape index: {}]
  %s1 = inlined_call_operand.hbm [shape: f32[64,96], index: 1, kind: input, shape index: {}]
  %s2 = inlined_call_operand.hbm [shape: f32[32,96], index: 2, kind: input, shape index: {}]
  %s3 = inlined_call_operand.vmem [shape: f32[2,96], index: 3, kind: input, shape index: {}]
  %s4 = inlined_call_operand.hbm [shape: f32[32,32], index: 4, kind: input, shape index: {}]
  %s5 = inlined_call_operand.vmem [shape: f32[1,32], index: 5, kind: input, shape index: {}]
  %s6 = inlined_call_operand.hbm [shape: f32[8,32], index: 6, kind: output, shape index: {}]
  %s7 = sld [smem:[#allocation0]]
  $region50: #{tpu_custom_call.1} parent=0
    _
  %s9 = ssub.s32 1, %s7
  %s10 = scalar_select 0, %s9, %s7
  $region1: #{tpu_custom_call.1} parent=0
    #allocation3 [shape = 'u8[4096]{0}', space=vmem, size = 0x1000, scoped, tag = 'input window, operand 0, single buffered']
    #allocation4 [shape = 's32[1]{0}', space=sflag, size = 0x4, scoped, tag = 'scoped memory for tpu_custom_call.1']
    #allocation5 [shape = 's32[1]{0}', space=sflag, size = 0x4, scoped, tag = 'scoped memory for tpu_custom_call.1']
    #allocation6 [shape = 'u8[32768]{0}', space=vmem, size = 0x8000, scoped, tag = 'input window, operand 1, single buffered']
    #allocation7 [shape = 's32[1]{0}', space=sflag, size = 0x4, scoped, tag = 'scoped memory for tpu_custom_call.1']
    #allocation8 [shape = 'u8[16384]{0}', space=vmem, size = 0x4000, scoped, tag = 'input window, operand 2, single buffered']
    #allocation9 [shape = 'u8[16384]{0}', space=vmem, size = 0x4000, scoped, tag = 'input window, operand 4, single buffered']
    #allocation10 [shape = 's32[1]{0}', space=sflag, size = 0x4, scoped, tag = 'scoped memory for tpu_custom_call.1']
    #allocation11 [shape = 'u8[4096]{0}', space=vmem, size = 0x1000, scoped, tag = 'output window, operand 0, single buffered']
    %11 = vsyncpa [#allocation4], 0
    %12 = vsyncpa [#allocation7], 0
    %13 = vsyncpa [#allocation10], 0
    %14 = vsyncpa [#allocation5], 0
    // Predicated region
    $region2: #{tpu_custom_call.1} parent=1 // pred_check
      _
    $region3: #{tpu_custom_call.1} parent=1 // pred_check_branch
      %16 = sbr.rel (0) target = $region5
    $region4: #{tpu_custom_call.1} parent=1 // pred_region
      %s18 = ssub.s32 128, 128
      %19 = vsyncadd [#allocation4], %s18
      %s21 = sshll.u32 [#allocation3], 4
      %s22 = int_to_ptr.vmem [resolvable:$true] %s21
      %24 = dma.hbm_to_vmem [thread:$0]  %s0, 128, %s22, [#allocation4]
    $region5: #{tpu_custom_call.1} parent=1 // pred_fallthru
      _
    // Predicated region
    $region6: #{tpu_custom_call.1} parent=1 // pred_check
      _
    $region7: #{tpu_custom_call.1} parent=1 // pred_check_branch
      %26 = sbr.rel (0) target = $region9
    $region8: #{tpu_custom_call.1} parent=1 // pred_region
      %s28 = ssub.s32 1024, 1024
      %29 = vsyncadd [#allocation7], %s28
      %s30 = sshll.u32 [#allocation6], 4
      %s31 = int_to_ptr.vmem [resolvable:$true] %s30
      %36 = dma.hbm_to_vmem [thread:$0]  %s1, 1024, %s31, [#allocation7], 128, 128, 8
    $region9: #{tpu_custom_call.1} parent=1 // pred_fallthru
      _
    // Predicated region
    $region10: #{tpu_custom_call.1} parent=1 // pred_check
      _
    $region11: #{tpu_custom_call.1} parent=1 // pred_check_branch
      %38 = sbr.rel (0) target = $region13
    $region12: #{tpu_custom_call.1} parent=1 // pred_region
      %s40 = ssub.s32 512, 512
      %41 = vsyncadd [#allocation7], %s40
      %s42 = sshll.u32 [#allocation8], 4
      %s43 = int_to_ptr.vmem [resolvable:$true] %s42
      %48 = dma.hbm_to_vmem [thread:$0]  %s2, 512, %s43, [#allocation7], 128, 128, 8
    $region13: #{tpu_custom_call.1} parent=1 // pred_fallthru
      _
    // Predicated region
    $region14: #{tpu_custom_call.1} parent=1 // pred_check
      _
    $region15: #{tpu_custom_call.1} parent=1 // pred_check_branch
      %50 = sbr.rel (0) target = $region17
    $region16: #{tpu_custom_call.1} parent=1 // pred_region
      _
    $region17: #{tpu_custom_call.1} parent=1 // pred_fallthru
      _
    // Predicated region
    $region18: #{tpu_custom_call.1} parent=1 // pred_check
      _
    $region19: #{tpu_custom_call.1} parent=1 // pred_check_branch
      %52 = sbr.rel (0) target = $region21
    $region20: #{tpu_custom_call.1} parent=1 // pred_region
      %s54 = ssub.s32 512, 512
      %55 = vsyncadd [#allocation10], %s54
      %s56 = sshll.u32 [#allocation9], 4
      %s57 = int_to_ptr.vmem [resolvable:$true] %s56
      %62 = dma.hbm_to_vmem [thread:$0]  %s4, 512, %s57, [#allocation10], 128, 128, 8
    $region21: #{tpu_custom_call.1} parent=1 // pred_fallthru
      _
    // Predicated region
    $region22: #{tpu_custom_call.1} parent=1 // pred_check
      _
    $region23: #{tpu_custom_call.1} parent=1 // pred_check_branch
      %64 = sbr.rel (0) target = $region25
    $region24: #{tpu_custom_call.1} parent=1 // pred_region
      _
    $region25: #{tpu_custom_call.1} parent=1 // pred_fallthru
      _
    // Predicated region
    $region26: #{tpu_custom_call.1} parent=1 // pred_check
      _
    $region27: #{tpu_custom_call.1} parent=1 // pred_check_branch
      %66 = sbr.rel (0) target = $region29
    $region28: #{tpu_custom_call.1} parent=1 // pred_region
      %67 = dma.done [#allocation4], 128
    $region29: #{tpu_custom_call.1} parent=1 // pred_fallthru
      _
    // Predicated region
    $region30: #{tpu_custom_call.1} parent=1 // pred_check
      _
    $region31: #{tpu_custom_call.1} parent=1 // pred_check_branch
      %69 = sbr.rel (0) target = $region33
    $region32: #{tpu_custom_call.1} parent=1 // pred_region
      %70 = dma.done [#allocation7], 1024
    $region33: #{tpu_custom_call.1} parent=1 // pred_fallthru
      _
    // Predicated region
    $region34: #{tpu_custom_call.1} parent=1 // pred_check
      _
    $region35: #{tpu_custom_call.1} parent=1 // pred_check_branch
      %72 = sbr.rel (0) target = $region37
    $region36: #{tpu_custom_call.1} parent=1 // pred_region
      %73 = dma.done [#allocation7], 512
    $region37: #{tpu_custom_call.1} parent=1 // pred_fallthru
      _
    // Predicated region
    $region38: #{tpu_custom_call.1} parent=1 // pred_check
      _
    $region39: #{tpu_custom_call.1} parent=1 // pred_check_branch
      %75 = sbr.rel (0) target = $region41
    $region40: #{tpu_custom_call.1} parent=1 // pred_region
      %76 = dma.done [#allocation10], 512
    $region41: #{tpu_custom_call.1} parent=1 // pred_fallthru
      _
    %v77 = vld [vmem:[%s3] sm:$0x1]
    %v78 = vld [vmem:[%s3 + $0x1] sm:$0x1]
    %v79 = vld [vmem:[#allocation3] sm:$0xff]
    %v80 = vld [vmem:[#allocation6] sm:$0xff]
    %v81 = vld [vmem:[#allocation6 + $0x8] sm:$0xff]
    %v82 = vld [vmem:[#allocation6 + $0x10] sm:$0xff]
    %v83 = vld [vmem:[#allocation6 + $0x18] sm:$0xff]
    %v84 = vld [vmem:[#allocation6 + $0x20] sm:$0xff]
    %v85 = vld [vmem:[#allocation6 + $0x28] sm:$0xff]
    %v86 = vld [vmem:[#allocation6 + $0x30] sm:$0xff]
    %v87 = vld [vmem:[#allocation6 + $0x38] sm:$0xff]
    %v88 = vlaneseq
    %v89 = vshrl.u32 %v88, 7
    %v90 = vsub.s32 0, %v89
    %v91 = vrot.slane %v77, %v90
    %vm92 = vcmask 523264
    %v94 = vsel %vm92, %v79, 0
    %96 = vmatprep.subr.mxu0 0.0
    %97 = vmatpush1.msra.mxu0 %v80
    %98 = vmatprep.subr.mxu0 0.0
    %99 = vmatpush1.msra.mxu0 %v81
    %100 = vmatprep.subr.mxu0 0.0
    %101 = vmatpush1.msra.mxu0 %v82
    %102 = vmatprep.subr.mxu0 0.0
    %103 = vmatpush1.msra.mxu0 %v83
    %104 = vmatprep.subr.mxu0 0.0
    %105 = vmatpush1.msra.mxu0 %v84
    %106 = vmatprep.subr.mxu0 0.0
    %107 = vmatpush1.msra.mxu0 %v85
    %108 = vmatprep.subr.mxu0 0.0
    %109 = vmatpush1.msra.mxu0 %v86
    %110 = vmatprep.subr.mxu0 0.0
    %111 = vmatpush1.msra.mxu0 %v87
    %112 = vmatprep.subr.mxu0 0.0
    %113 = vmatpush1.msra.mxu0 0.0
    %114 = vmatprep.subr.mxu0 0.0
    %115 = vmatpush1.msra.mxu0 0.0
    %116 = vmatprep.subr.mxu0 0.0
    %117 = vmatpush1.msra.mxu0 0.0
    %118 = vmatprep.subr.mxu0 0.0
    %119 = vmatpush1.msra.mxu0 0.0
    %120 = vmatprep.subr.mxu0 0.0
    %121 = vmatpush1.msra.mxu0 0.0
    %122 = vmatprep.subr.mxu0 0.0
    %123 = vmatpush1.msra.mxu0 0.0
    %124 = vmatprep.subr.mxu0 0.0
    %125 = vmatpush1.msra.mxu0 0.0
    %126 = vmatprep.subr.mxu0 0.0
    %127 = vmatpush1.msra.mxu0 0.0
    %128 = vmatprep.subr.mxu0 0.0
    %129 = vmatpush1.msra.mxu0 0.0
    %130 = vmatprep.subr.mxu0 0.0
    %131 = vmatpush1.msra.mxu0 0.0
    %132 = vmatprep.subr.mxu0 0.0
    %133 = vmatpush1.msra.mxu0 0.0
    %134 = vmatprep.subr.mxu0 0.0
    %135 = vmatpush1.msra.mxu0 0.0
    %136 = vmatprep.subr.mxu0 0.0
    %137 = vmatpush1.msra.mxu0 0.0
    %138 = vmatprep.subr.mxu0 0.0
    %139 = vmatpush1.msra.mxu0 0.0
    %140 = vmatprep.subr.mxu0 0.0
    %141 = vmatpush1.msra.mxu0 0.0
    %142 = vmatprep.subr.mxu0 0.0
    %143 = vmatpush1.msra.mxu0 0.0
    %144 = vmatprep.subr.mxu0 0.0
    %145 = vmatpush1.msra.mxu0 0.0
    %146 = vmatprep.subr.mxu0 0.0
    %147 = vmatpush1.msra.mxu0 0.0
    %148 = vmatprep.subr.mxu0 0.0
    %149 = vmatpush1.msra.mxu0 0.0
    %150 = vmatprep.subr.mxu0 0.0
    %151 = vmatpush1.msra.mxu0 0.0
    %152 = vmatprep.subr.mxu0 0.0
    %153 = vmatpush1.msra.mxu0 0.0
    %154 = vmatprep.subr.mxu0 0.0
    %155 = vmatpush1.msra.mxu0 0.0
    %156 = vmatprep.subr.mxu0 0.0
    %157 = vmatpush1.msra.mxu0 0.0
    %158 = vmatprep.subr.mxu0 0.0
    %159 = vmatpush1.msra.mxu0 0.0
    %160 = vmatprep.mubr.f32.mxu0 0.0
    %161 = vmatmul.mubr.f32.gmra.mrb[0].mxu0 %v94
    %v162 = vpop.f32.mrb[0].mxu0
    %v163 = vadd.f32 %v91, %v162
    %v164 = vpop.f32.mrb[0].mxu0
    %165 = vdwg.mxu0
    %v166 = vld [vmem:[#allocation8] sm:$0xff]
    %v167 = vld [vmem:[#allocation8 + $0x8] sm:$0xff]
    %v168 = vld [vmem:[#allocation8 + $0x10] sm:$0xff]
    %v169 = vld [vmem:[#allocation8 + $0x18] sm:$0xff]
    %vm170 = vcmask 261120
    %v172 = vsel %vm170, 0.0, 0
    %174 = vmatprep.subr.mxu0 0.0
    %175 = vmatpush1.msra.mxu0 %v166
    %176 = vmatprep.subr.mxu0 0.0
    %177 = vmatpush1.msra.mxu0 %v167
    %178 = vmatprep.subr.mxu0 0.0
    %179 = vmatpush1.msra.mxu0 %v168
    %180 = vmatprep.subr.mxu0 0.0
    %181 = vmatpush1.msra.mxu0 %v169
    %182 = vmatprep.subr.mxu0 0.0
    %183 = vmatpush1.msra.mxu0 0.0
    %184 = vmatprep.subr.mxu0 0.0
    %185 = vmatpush1.msra.mxu0 0.0
    %186 = vmatprep.subr.mxu0 0.0
    %187 = vmatpush1.msra.mxu0 0.0
    %188 = vmatprep.subr.mxu0 0.0
    %189 = vmatpush1.msra.mxu0 0.0
    %190 = vmatprep.subr.mxu0 0.0
    %191 = vmatpush1.msra.mxu0 0.0
    %192 = vmatprep.subr.mxu0 0.0
    %193 = vmatpush1.msra.mxu0 0.0
    %194 = vmatprep.subr.mxu0 0.0
    %195 = vmatpush1.msra.mxu0 0.0
    %196 = vmatprep.subr.mxu0 0.0
    %197 = vmatpush1.msra.mxu0 0.0
    %198 = vmatprep.subr.mxu0 0.0
    %199 = vmatpush1.msra.mxu0 0.0
    %200 = vmatprep.subr.mxu0 0.0
    %201 = vmatpush1.msra.mxu0 0.0
    %202 = vmatprep.subr.mxu0 0.0
    %203 = vmatpush1.msra.mxu0 0.0
    %204 = vmatprep.subr.mxu0 0.0
    %205 = vmatpush1.msra.mxu0 0.0
    %206 = vmatprep.subr.mxu0 0.0
    %207 = vmatpush1.msra.mxu0 0.0
    %208 = vmatprep.subr.mxu0 0.0
    %209 = vmatpush1.msra.mxu0 0.0
    %210 = vmatprep.subr.mxu0 0.0
    %211 = vmatpush1.msra.mxu0 0.0
    %212 = vmatprep.subr.mxu0 0.0
    %213 = vmatpush1.msra.mxu0 0.0
    %214 = vmatprep.subr.mxu0 0.0
    %215 = vmatpush1.msra.mxu0 0.0
    %216 = vmatprep.subr.mxu0 0.0
    %217 = vmatpush1.msra.mxu0 0.0
    %218 = vmatprep.subr.mxu0 0.0
    %219 = vmatpush1.msra.mxu0 0.0
    %220 = vmatprep.subr.mxu0 0.0
    %221 = vmatpush1.msra.mxu0 0.0
    %222 = vmatprep.subr.mxu0 0.0
    %223 = vmatpush1.msra.mxu0 0.0
    %224 = vmatprep.subr.mxu0 0.0
    %225 = vmatpush1.msra.mxu0 0.0
    %226 = vmatprep.subr.mxu0 0.0
    %227 = vmatpush1.msra.mxu0 0.0
    %228 = vmatprep.subr.mxu0 0.0
    %229 = vmatpush1.msra.mxu0 0.0
    %230 = vmatprep.subr.mxu0 0.0
    %231 = vmatpush1.msra.mxu0 0.0
    %232 = vmatprep.subr.mxu0 0.0
    %233 = vmatpush1.msra.mxu0 0.0
    %234 = vmatprep.subr.mxu0 0.0
    %235 = vmatpush1.msra.mxu0 0.0
    %236 = vmatprep.subr.mxu0 0.0
    %237 = vmatpush1.msra.mxu0 0.0
    %238 = vmatprep.mubr.f32.mxu0 0.0
    %239 = vmatmul.mubr.f32.gmra.mrb[0].mxu0 %v172
    %v240 = vpop.f32.mrb[0].mxu0
    %v241 = vadd.f32 %v78, %v240
    %v242 = vpop.f32.mrb[0].mxu0
    %243 = vdwg.mxu0
    %v244 = vadd.f32 %v163, %v241
    %v245 = vxor.u32 %v244, 2147483648
    %v246 = vmul.f32 %v245, 1.442695
    %v247 = vpow.pop %v246
    %v248 = vadd.f32 %v247, 1.0
    %v249 = vrcp.pop %v248
    %v250 = vmul.f32 1.0, %v249
    %252 = vrot.lane.b32.xlu0 %v241, 64
    %v253 = vpop.permute.xlu0 %252
    %v255 = vmul.f32 %v250, %v253
    %257 = vrot.lane.b32.xlu0 %v255, 64
    %v258 = vpop.permute.xlu0 %257
    %v260 = vadd.f32 %v163, %v258
    %v261 = vtanh.pop %v260
    %v262 = vsub.f32 1.0, %v250
    %264 = vrot.lane.b32.xlu0 %v261, 96
    %v265 = vpop.permute.xlu0 %264
    %v267 = vmul.f32 %v262, %v265
    %v268 = vmul.f32 %v250, 0.0
    %v269 = vadd.f32 %v267, %v268
    %271 = vrot.lane.b32.xlu0 %v269, 96
    %v272 = vpop.permute.xlu0 %271
    %vm274 = vcmask 253952
    %275 = vst.msk [vmem:[#allocation2] sm:$0x1] %vm274, %v272
    %v276 = vsel %vm170, %v272, 0
    %278 = vmatprep.subr.mxu0 0.0
    %279 = vmatpush1.msra.mxu0 %v166
    %280 = vmatprep.subr.mxu0 0.0
    %281 = vmatpush1.msra.mxu0 %v167
    %282 = vmatprep.subr.mxu0 0.0
    %283 = vmatpush1.msra.mxu0 %v168
    %284 = vmatprep.subr.mxu0 0.0
    %285 = vmatpush1.msra.mxu0 %v169
    %286 = vmatprep.subr.mxu0 0.0
    %287 = vmatpush1.msra.mxu0 0.0
    %288 = vmatprep.subr.mxu0 0.0
    %289 = vmatpush1.msra.mxu0 0.0
    %290 = vmatprep.subr.mxu0 0.0
    %291 = vmatpush1.msra.mxu0 0.0
    %292 = vmatprep.subr.mxu0 0.0
    %293 = vmatpush1.msra.mxu0 0.0
    %294 = vmatprep.subr.mxu0 0.0
    %295 = vmatpush1.msra.mxu0 0.0
    %296 = vmatprep.subr.mxu0 0.0
    %297 = vmatpush1.msra.mxu0 0.0
    %298 = vmatprep.subr.mxu0 0.0
    %299 = vmatpush1.msra.mxu0 0.0
    %300 = vmatprep.subr.mxu0 0.0
    %301 = vmatpush1.msra.mxu0 0.0
    %302 = vmatprep.subr.mxu0 0.0
    %303 = vmatpush1.msra.mxu0 0.0
    %304 = vmatprep.subr.mxu0 0.0
    %305 = vmatpush1.msra.mxu0 0.0
    %306 = vmatprep.subr.mxu0 0.0
    %307 = vmatpush1.msra.mxu0 0.0
    %308 = vmatprep.subr.mxu0 0.0
    %309 = vmatpush1.msra.mxu0 0.0
    %310 = vmatprep.subr.mxu0 0.0
    %311 = vmatpush1.msra.mxu0 0.0
    %312 = vmatprep.subr.mxu0 0.0
    %313 = vmatpush1.msra.mxu0 0.0
    %314 = vmatprep.subr.mxu0 0.0
    %315 = vmatpush1.msra.mxu0 0.0
    %316 = vmatprep.subr.mxu0 0.0
    %317 = vmatpush1.msra.mxu0 0.0
    %318 = vmatprep.subr.mxu0 0.0
    %319 = vmatpush1.msra.mxu0 0.0
    %320 = vmatprep.subr.mxu0 0.0
    %321 = vmatpush1.msra.mxu0 0.0
    %322 = vmatprep.subr.mxu0 0.0
    %323 = vmatpush1.msra.mxu0 0.0
    %324 = vmatprep.subr.mxu0 0.0
    %325 = vmatpush1.msra.mxu0 0.0
    %326 = vmatprep.subr.mxu0 0.0
    %327 = vmatpush1.msra.mxu0 0.0
    %328 = vmatprep.subr.mxu0 0.0
    %329 = vmatpush1.msra.mxu0 0.0
    %330 = vmatprep.subr.mxu0 0.0
    %331 = vmatpush1.msra.mxu0 0.0
    %332 = vmatprep.subr.mxu0 0.0
    %333 = vmatpush1.msra.mxu0 0.0
    %334 = vmatprep.subr.mxu0 0.0
    %335 = vmatpush1.msra.mxu0 0.0
    %336 = vmatprep.subr.mxu0 0.0
    %337 = vmatpush1.msra.mxu0 0.0
    %338 = vmatprep.subr.mxu0 0.0
    %339 = vmatpush1.msra.mxu0 0.0
    %340 = vmatprep.subr.mxu0 0.0
    %341 = vmatpush1.msra.mxu0 0.0
    %342 = vmatprep.mubr.f32.mxu0 0.0
    %343 = vmatmul.mubr.f32.gmra.mrb[0].mxu0 %v276
    %v344 = vpop.f32.mrb[0].mxu0
    %v345 = vadd.f32 %v78, %v344
    %v346 = vpop.f32.mrb[0].mxu0
    %347 = vdwg.mxu0
    %v349 = vrot.slane %v345, 7
    %v351 = vadd.f32 %v163, %v349
    %v352 = vxor.u32 %v351, 2147483648
    %v353 = vmul.f32 %v352, 1.442695
    %v354 = vpow.pop %v353
    %v355 = vadd.f32 %v354, 1.0
    %v356 = vrcp.pop %v355
    %v357 = vmul.f32 1.0, %v356
    %358 = vrot.lane.b32.xlu0 %v349, 64
    %v359 = vpop.permute.xlu0 %358
    %v361 = vmul.f32 %v357, %v359
    %363 = vrot.lane.b32.xlu0 %v361, 64
    %v364 = vpop.permute.xlu0 %363
    %v366 = vadd.f32 %v163, %v364
    %v367 = vtanh.pop %v366
    %v368 = vsub.f32 1.0, %v357
    %370 = vrot.lane.b32.xlu0 %v367, 96
    %v371 = vpop.permute.xlu0 %370
    %v373 = vmul.f32 %v368, %v371
    %v374 = vrot.slane %v269, 7
    %v376 = vmul.f32 %v357, %v374
    %v377 = vadd.f32 %v373, %v376
    %379 = vrot.lane.b32.xlu0 %v377, 96
    %v380 = vpop.permute.xlu0 %379
    %vm382 = vcmask 254977
    %383 = vst.msk [vmem:[#allocation2] sm:$0x2] %vm382, %v380
    %v384 = vrot.slane %v377, 1
    %385 = vrot.lane.b32.xlu0 %v384, 96
    %v386 = vpop.permute.xlu0 %385
    %v387 = vsel %vm170, %v386, 0
    %389 = vmatprep.subr.mxu0 0.0
    %390 = vmatpush1.msra.mxu0 %v166
    %391 = vmatprep.subr.mxu0 0.0
    %392 = vmatpush1.msra.mxu0 %v167
    %393 = vmatprep.subr.mxu0 0.0
    %394 = vmatpush1.msra.mxu0 %v168
    %395 = vmatprep.subr.mxu0 0.0
    %396 = vmatpush1.msra.mxu0 %v169
    %397 = vmatprep.subr.mxu0 0.0
    %398 = vmatpush1.msra.mxu0 0.0
    %399 = vmatprep.subr.mxu0 0.0
    %400 = vmatpush1.msra.mxu0 0.0
    %401 = vmatprep.subr.mxu0 0.0
    %402 = vmatpush1.msra.mxu0 0.0
    %403 = vmatprep.subr.mxu0 0.0
    %404 = vmatpush1.msra.mxu0 0.0
    %405 = vmatprep.subr.mxu0 0.0
    %406 = vmatpush1.msra.mxu0 0.0
    %407 = vmatprep.subr.mxu0 0.0
    %408 = vmatpush1.msra.mxu0 0.0
    %409 = vmatprep.subr.mxu0 0.0
    %410 = vmatpush1.msra.mxu0 0.0
    %411 = vmatprep.subr.mxu0 0.0
    %412 = vmatpush1.msra.mxu0 0.0
    %413 = vmatprep.subr.mxu0 0.0
    %414 = vmatpush1.msra.mxu0 0.0
    %415 = vmatprep.subr.mxu0 0.0
    %416 = vmatpush1.msra.mxu0 0.0
    %417 = vmatprep.subr.mxu0 0.0
    %418 = vmatpush1.msra.mxu0 0.0
    %419 = vmatprep.subr.mxu0 0.0
    %420 = vmatpush1.msra.mxu0 0.0
    %421 = vmatprep.subr.mxu0 0.0
    %422 = vmatpush1.msra.mxu0 0.0
    %423 = vmatprep.subr.mxu0 0.0
    %424 = vmatpush1.msra.mxu0 0.0
    %425 = vmatprep.subr.mxu0 0.0
    %426 = vmatpush1.msra.mxu0 0.0
    %427 = vmatprep.subr.mxu0 0.0
    %428 = vmatpush1.msra.mxu0 0.0
    %429 = vmatprep.subr.mxu0 0.0
    %430 = vmatpush1.msra.mxu0 0.0
    %431 = vmatprep.subr.mxu0 0.0
    %432 = vmatpush1.msra.mxu0 0.0
    %433 = vmatprep.subr.mxu0 0.0
    %434 = vmatpush1.msra.mxu0 0.0
    %435 = vmatprep.subr.mxu0 0.0
    %436 = vmatpush1.msra.mxu0 0.0
    %437 = vmatprep.subr.mxu0 0.0
    %438 = vmatpush1.msra.mxu0 0.0
    %439 = vmatprep.subr.mxu0 0.0
    %440 = vmatpush1.msra.mxu0 0.0
    %441 = vmatprep.subr.mxu0 0.0
    %442 = vmatpush1.msra.mxu0 0.0
    %443 = vmatprep.subr.mxu0 0.0
    %444 = vmatpush1.msra.mxu0 0.0
    %445 = vmatprep.subr.mxu0 0.0
    %446 = vmatpush1.msra.mxu0 0.0
    %447 = vmatprep.subr.mxu0 0.0
    %448 = vmatpush1.msra.mxu0 0.0
    %449 = vmatprep.subr.mxu0 0.0
    %450 = vmatpush1.msra.mxu0 0.0
    %451 = vmatprep.subr.mxu0 0.0
    %452 = vmatpush1.msra.mxu0 0.0
    %453 = vmatprep.mubr.f32.mxu0 0.0
    %454 = vmatmul.mubr.f32.gmra.mrb[0].mxu0 %v387
    %v455 = vpop.f32.mrb[0].mxu0
    %v456 = vadd.f32 %v78, %v455
    %v457 = vpop.f32.mrb[0].mxu0
    %458 = vdwg.mxu0
    %v460 = vrot.slane %v456, 6
    %v462 = vadd.f32 %v163, %v460
    %v463 = vxor.u32 %v462, 2147483648
    %v464 = vmul.f32 %v463, 1.442695
    %v465 = vpow.pop %v464
    %v466 = vadd.f32 %v465, 1.0
    %v467 = vrcp.pop %v466
    %v468 = vmul.f32 1.0, %v467
    %469 = vrot.lane.b32.xlu0 %v460, 64
    %v470 = vpop.permute.xlu0 %469
    %v472 = vmul.f32 %v468, %v470
    %474 = vrot.lane.b32.xlu0 %v472, 64
    %v475 = vpop.permute.xlu0 %474
    %v477 = vadd.f32 %v163, %v475
    %v478 = vtanh.pop %v477
    %v479 = vsub.f32 1.0, %v468
    %481 = vrot.lane.b32.xlu0 %v478, 96
    %v482 = vpop.permute.xlu0 %481
    %v484 = vmul.f32 %v479, %v482
    %v485 = vrot.slane %v377, 7
    %v487 = vmul.f32 %v468, %v485
    %v488 = vadd.f32 %v484, %v487
    %490 = vrot.lane.b32.xlu0 %v488, 96
    %v491 = vpop.permute.xlu0 %490
    %vm493 = vcmask 256002
    %494 = vst.msk [vmem:[#allocation2] sm:$0x4] %vm493, %v491
    %v495 = vrot.slane %v488, 2
    %496 = vrot.lane.b32.xlu0 %v495, 96
    %v497 = vpop.permute.xlu0 %496
    %v498 = vsel %vm170, %v497, 0
    %500 = vmatprep.subr.mxu0 0.0
    %501 = vmatpush1.msra.mxu0 %v166
    %502 = vmatprep.subr.mxu0 0.0
    %503 = vmatpush1.msra.mxu0 %v167
    %504 = vmatprep.subr.mxu0 0.0
    %505 = vmatpush1.msra.mxu0 %v168
    %506 = vmatprep.subr.mxu0 0.0
    %507 = vmatpush1.msra.mxu0 %v169
    %508 = vmatprep.subr.mxu0 0.0
    %509 = vmatpush1.msra.mxu0 0.0
    %510 = vmatprep.subr.mxu0 0.0
    %511 = vmatpush1.msra.mxu0 0.0
    %512 = vmatprep.subr.mxu0 0.0
    %513 = vmatpush1.msra.mxu0 0.0
    %514 = vmatprep.subr.mxu0 0.0
    %515 = vmatpush1.msra.mxu0 0.0
    %516 = vmatprep.subr.mxu0 0.0
    %517 = vmatpush1.msra.mxu0 0.0
    %518 = vmatprep.subr.mxu0 0.0
    %519 = vmatpush1.msra.mxu0 0.0
    %520 = vmatprep.subr.mxu0 0.0
    %521 = vmatpush1.msra.mxu0 0.0
    %522 = vmatprep.subr.mxu0 0.0
    %523 = vmatpush1.msra.mxu0 0.0
    %524 = vmatprep.subr.mxu0 0.0
    %525 = vmatpush1.msra.mxu0 0.0
    %526 = vmatprep.subr.mxu0 0.0
    %527 = vmatpush1.msra.mxu0 0.0
    %528 = vmatprep.subr.mxu0 0.0
    %529 = vmatpush1.msra.mxu0 0.0
    %530 = vmatprep.subr.mxu0 0.0
    %531 = vmatpush1.msra.mxu0 0.0
    %532 = vmatprep.subr.mxu0 0.0
    %533 = vmatpush1.msra.mxu0 0.0
    %534 = vmatprep.subr.mxu0 0.0
    %535 = vmatpush1.msra.mxu0 0.0
    %536 = vmatprep.subr.mxu0 0.0
    %537 = vmatpush1.msra.mxu0 0.0
    %538 = vmatprep.subr.mxu0 0.0
    %539 = vmatpush1.msra.mxu0 0.0
    %540 = vmatprep.subr.mxu0 0.0
    %541 = vmatpush1.msra.mxu0 0.0
    %542 = vmatprep.subr.mxu0 0.0
    %543 = vmatpush1.msra.mxu0 0.0
    %544 = vmatprep.subr.mxu0 0.0
    %545 = vmatpush1.msra.mxu0 0.0
    %546 = vmatprep.subr.mxu0 0.0
    %547 = vmatpush1.msra.mxu0 0.0
    %548 = vmatprep.subr.mxu0 0.0
    %549 = vmatpush1.msra.mxu0 0.0
    %550 = vmatprep.subr.mxu0 0.0
    %551 = vmatpush1.msra.mxu0 0.0
    %552 = vmatprep.subr.mxu0 0.0
    %553 = vmatpush1.msra.mxu0 0.0
    %554 = vmatprep.subr.mxu0 0.0
    %555 = vmatpush1.msra.mxu0 0.0
    %556 = vmatprep.subr.mxu0 0.0
    %557 = vmatpush1.msra.mxu0 0.0
    %558 = vmatprep.subr.mxu0 0.0
    %559 = vmatpush1.msra.mxu0 0.0
    %560 = vmatprep.subr.mxu0 0.0
    %561 = vmatpush1.msra.mxu0 0.0
    %562 = vmatprep.subr.mxu0 0.0
    %563 = vmatpush1.msra.mxu0 0.0
    %564 = vmatprep.mubr.f32.mxu0 0.0
    %565 = vmatmul.mubr.f32.gmra.mrb[0].mxu0 %v498
    %v566 = vpop.f32.mrb[0].mxu0
    %v567 = vadd.f32 %v78, %v566
    %v568 = vpop.f32.mrb[0].mxu0
    %569 = vdwg.mxu0
    %v571 = vrot.slane %v567, 5
    %v573 = vadd.f32 %v163, %v571
    %v574 = vxor.u32 %v573, 2147483648
    %v575 = vmul.f32 %v574, 1.442695
    %v576 = vpow.pop %v575
    %v577 = vadd.f32 %v576, 1.0
    %v578 = vrcp.pop %v577
    %v579 = vmul.f32 1.0, %v578
    %580 = vrot.lane.b32.xlu0 %v571, 64
    %v581 = vpop.permute.xlu0 %580
    %v583 = vmul.f32 %v579, %v581
    %585 = vrot.lane.b32.xlu0 %v583, 64
    %v586 = vpop.permute.xlu0 %585
    %v588 = vadd.f32 %v163, %v586
    %v589 = vtanh.pop %v588
    %v590 = vsub.f32 1.0, %v579
    %592 = vrot.lane.b32.xlu0 %v589, 96
    %v593 = vpop.permute.xlu0 %592
    %v595 = vmul.f32 %v590, %v593
    %v596 = vrot.slane %v488, 7
    %v598 = vmul.f32 %v579, %v596
    %v599 = vadd.f32 %v595, %v598
    %601 = vrot.lane.b32.xlu0 %v599, 96
    %v602 = vpop.permute.xlu0 %601
    %vm604 = vcmask 257027
    %605 = vst.msk [vmem:[#allocation2] sm:$0x8] %vm604, %v602
    %v606 = vrot.slane %v599, 3
    %607 = vrot.lane.b32.xlu0 %v606, 96
    %v608 = vpop.permute.xlu0 %607
    %v609 = vsel %vm170, %v608, 0
    %611 = vmatprep.subr.mxu0 0.0
    %612 = vmatpush1.msra.mxu0 %v166
    %613 = vmatprep.subr.mxu0 0.0
    %614 = vmatpush1.msra.mxu0 %v167
    %615 = vmatprep.subr.mxu0 0.0
    %616 = vmatpush1.msra.mxu0 %v168
    %617 = vmatprep.subr.mxu0 0.0
    %618 = vmatpush1.msra.mxu0 %v169
    %619 = vmatprep.subr.mxu0 0.0
    %620 = vmatpush1.msra.mxu0 0.0
    %621 = vmatprep.subr.mxu0 0.0
    %622 = vmatpush1.msra.mxu0 0.0
    %623 = vmatprep.subr.mxu0 0.0
    %624 = vmatpush1.msra.mxu0 0.0
    %625 = vmatprep.subr.mxu0 0.0
    %626 = vmatpush1.msra.mxu0 0.0
    %627 = vmatprep.subr.mxu0 0.0
    %628 = vmatpush1.msra.mxu0 0.0
    %629 = vmatprep.subr.mxu0 0.0
    %630 = vmatpush1.msra.mxu0 0.0
    %631 = vmatprep.subr.mxu0 0.0
    %632 = vmatpush1.msra.mxu0 0.0
    %633 = vmatprep.subr.mxu0 0.0
    %634 = vmatpush1.msra.mxu0 0.0
    %635 = vmatprep.subr.mxu0 0.0
    %636 = vmatpush1.msra.mxu0 0.0
    %637 = vmatprep.subr.mxu0 0.0
    %638 = vmatpush1.msra.mxu0 0.0
    %639 = vmatprep.subr.mxu0 0.0
    %640 = vmatpush1.msra.mxu0 0.0
    %641 = vmatprep.subr.mxu0 0.0
    %642 = vmatpush1.msra.mxu0 0.0
    %643 = vmatprep.subr.mxu0 0.0
    %644 = vmatpush1.msra.mxu0 0.0
    %645 = vmatprep.subr.mxu0 0.0
    %646 = vmatpush1.msra.mxu0 0.0
    %647 = vmatprep.subr.mxu0 0.0
    %648 = vmatpush1.msra.mxu0 0.0
    %649 = vmatprep.subr.mxu0 0.0
    %650 = vmatpush1.msra.mxu0 0.0
    %651 = vmatprep.subr.mxu0 0.0
    %652 = vmatpush1.msra.mxu0 0.0
    %653 = vmatprep.subr.mxu0 0.0
    %654 = vmatpush1.msra.mxu0 0.0
    %655 = vmatprep.subr.mxu0 0.0
    %656 = vmatpush1.msra.mxu0 0.0
    %657 = vmatprep.subr.mxu0 0.0
    %658 = vmatpush1.msra.mxu0 0.0
    %659 = vmatprep.subr.mxu0 0.0
    %660 = vmatpush1.msra.mxu0 0.0
    %661 = vmatprep.subr.mxu0 0.0
    %662 = vmatpush1.msra.mxu0 0.0
    %663 = vmatprep.subr.mxu0 0.0
    %664 = vmatpush1.msra.mxu0 0.0
    %665 = vmatprep.subr.mxu0 0.0
    %666 = vmatpush1.msra.mxu0 0.0
    %667 = vmatprep.subr.mxu0 0.0
    %668 = vmatpush1.msra.mxu0 0.0
    %669 = vmatprep.subr.mxu0 0.0
    %670 = vmatpush1.msra.mxu0 0.0
    %671 = vmatprep.subr.mxu0 0.0
    %672 = vmatpush1.msra.mxu0 0.0
    %673 = vmatprep.subr.mxu0 0.0
    %674 = vmatpush1.msra.mxu0 0.0
    %675 = vmatprep.mubr.f32.mxu0 0.0
    %676 = vmatmul.mubr.f32.gmra.mrb[0].mxu0 %v609
    %v677 = vpop.f32.mrb[0].mxu0
    %v678 = vadd.f32 %v78, %v677
    %v679 = vpop.f32.mrb[0].mxu0
    %680 = vdwg.mxu0
    %v682 = vrot.slane %v678, 4
    %v684 = vadd.f32 %v163, %v682
    %v685 = vxor.u32 %v684, 2147483648
    %v686 = vmul.f32 %v685, 1.442695
    %v687 = vpow.pop %v686
    %v688 = vadd.f32 %v687, 1.0
    %v689 = vrcp.pop %v688
    %v690 = vmul.f32 1.0, %v689
    %691 = vrot.lane.b32.xlu0 %v682, 64
    %v692 = vpop.permute.xlu0 %691
    %v694 = vmul.f32 %v690, %v692
    %696 = vrot.lane.b32.xlu0 %v694, 64
    %v697 = vpop.permute.xlu0 %696
    %v699 = vadd.f32 %v163, %v697
    %v700 = vtanh.pop %v699
    %v701 = vsub.f32 1.0, %v690
    %703 = vrot.lane.b32.xlu0 %v700, 96
    %v704 = vpop.permute.xlu0 %703
    %v706 = vmul.f32 %v701, %v704
    %v707 = vrot.slane %v599, 7
    %v709 = vmul.f32 %v690, %v707
    %v710 = vadd.f32 %v706, %v709
    %712 = vrot.lane.b32.xlu0 %v710, 96
    %v713 = vpop.permute.xlu0 %712
    %vm715 = vcmask 258052
    %716 = vst.msk [vmem:[#allocation2] sm:$0x10] %vm715, %v713
    %v717 = vrot.slane %v710, 4
    %718 = vrot.lane.b32.xlu0 %v717, 96
    %v719 = vpop.permute.xlu0 %718
    %v720 = vsel %vm170, %v719, 0
    %722 = vmatprep.subr.mxu0 0.0
    %723 = vmatpush1.msra.mxu0 %v166
    %724 = vmatprep.subr.mxu0 0.0
    %725 = vmatpush1.msra.mxu0 %v167
    %726 = vmatprep.subr.mxu0 0.0
    %727 = vmatpush1.msra.mxu0 %v168
    %728 = vmatprep.subr.mxu0 0.0
    %729 = vmatpush1.msra.mxu0 %v169
    %730 = vmatprep.subr.mxu0 0.0
    %731 = vmatpush1.msra.mxu0 0.0
    %732 = vmatprep.subr.mxu0 0.0
    %733 = vmatpush1.msra.mxu0 0.0
    %734 = vmatprep.subr.mxu0 0.0
    %735 = vmatpush1.msra.mxu0 0.0
    %736 = vmatprep.subr.mxu0 0.0
    %737 = vmatpush1.msra.mxu0 0.0
    %738 = vmatprep.subr.mxu0 0.0
    %739 = vmatpush1.msra.mxu0 0.0
    %740 = vmatprep.subr.mxu0 0.0
    %741 = vmatpush1.msra.mxu0 0.0
    %742 = vmatprep.subr.mxu0 0.0
    %743 = vmatpush1.msra.mxu0 0.0
    %744 = vmatprep.subr.mxu0 0.0
    %745 = vmatpush1.msra.mxu0 0.0
    %746 = vmatprep.subr.mxu0 0.0
    %747 = vmatpush1.msra.mxu0 0.0
    %748 = vmatprep.subr.mxu0 0.0
    %749 = vmatpush1.msra.mxu0 0.0
    %750 = vmatprep.subr.mxu0 0.0
    %751 = vmatpush1.msra.mxu0 0.0
    %752 = vmatprep.subr.mxu0 0.0
    %753 = vmatpush1.msra.mxu0 0.0
    %754 = vmatprep.subr.mxu0 0.0
    %755 = vmatpush1.msra.mxu0 0.0
    %756 = vmatprep.subr.mxu0 0.0
    %757 = vmatpush1.msra.mxu0 0.0
    %758 = vmatprep.subr.mxu0 0.0
    %759 = vmatpush1.msra.mxu0 0.0
    %760 = vmatprep.subr.mxu0 0.0
    %761 = vmatpush1.msra.mxu0 0.0
    %762 = vmatprep.subr.mxu0 0.0
    %763 = vmatpush1.msra.mxu0 0.0
    %764 = vmatprep.subr.mxu0 0.0
    %765 = vmatpush1.msra.mxu0 0.0
    %766 = vmatprep.subr.mxu0 0.0
    %767 = vmatpush1.msra.mxu0 0.0
    %768 = vmatprep.subr.mxu0 0.0
    %769 = vmatpush1.msra.mxu0 0.0
    %770 = vmatprep.subr.mxu0 0.0
    %771 = vmatpush1.msra.mxu0 0.0
    %772 = vmatprep.subr.mxu0 0.0
    %773 = vmatpush1.msra.mxu0 0.0
    %774 = vmatprep.subr.mxu0 0.0
    %775 = vmatpush1.msra.mxu0 0.0
    %776 = vmatprep.subr.mxu0 0.0
    %777 = vmatpush1.msra.mxu0 0.0
    %778 = vmatprep.subr.mxu0 0.0
    %779 = vmatpush1.msra.mxu0 0.0
    %780 = vmatprep.subr.mxu0 0.0
    %781 = vmatpush1.msra.mxu0 0.0
    %782 = vmatprep.subr.mxu0 0.0
    %783 = vmatpush1.msra.mxu0 0.0
    %784 = vmatprep.subr.mxu0 0.0
    %785 = vmatpush1.msra.mxu0 0.0
    %786 = vmatprep.mubr.f32.mxu0 0.0
    %787 = vmatmul.mubr.f32.gmra.mrb[0].mxu0 %v720
    %v788 = vpop.f32.mrb[0].mxu0
    %v789 = vadd.f32 %v78, %v788
    %v790 = vpop.f32.mrb[0].mxu0
    %791 = vdwg.mxu0
    %v793 = vrot.slane %v789, 3
    %v795 = vadd.f32 %v163, %v793
    %v796 = vxor.u32 %v795, 2147483648
    %v797 = vmul.f32 %v796, 1.442695
    %v798 = vpow.pop %v797
    %v799 = vadd.f32 %v798, 1.0
    %v800 = vrcp.pop %v799
    %v801 = vmul.f32 1.0, %v800
    %802 = vrot.lane.b32.xlu0 %v793, 64
    %v803 = vpop.permute.xlu0 %802
    %v805 = vmul.f32 %v801, %v803
    %807 = vrot.lane.b32.xlu0 %v805, 64
    %v808 = vpop.permute.xlu0 %807
    %v810 = vadd.f32 %v163, %v808
    %v811 = vtanh.pop %v810
    %v812 = vsub.f32 1.0, %v801
    %814 = vrot.lane.b32.xlu0 %v811, 96
    %v815 = vpop.permute.xlu0 %814
    %v817 = vmul.f32 %v812, %v815
    %v818 = vrot.slane %v710, 7
    %v820 = vmul.f32 %v801, %v818
    %v821 = vadd.f32 %v817, %v820
    %823 = vrot.lane.b32.xlu0 %v821, 96
    %v824 = vpop.permute.xlu0 %823
    %vm826 = vcmask 259077
    %827 = vst.msk [vmem:[#allocation2] sm:$0x20] %vm826, %v824
    %v828 = vrot.slane %v821, 5
    %829 = vrot.lane.b32.xlu0 %v828, 96
    %v830 = vpop.permute.xlu0 %829
    %v831 = vsel %vm170, %v830, 0
    %833 = vmatprep.subr.mxu0 0.0
    %834 = vmatpush1.msra.mxu0 %v166
    %835 = vmatprep.subr.mxu0 0.0
    %836 = vmatpush1.msra.mxu0 %v167
    %837 = vmatprep.subr.mxu0 0.0
    %838 = vmatpush1.msra.mxu0 %v168
    %839 = vmatprep.subr.mxu0 0.0
    %840 = vmatpush1.msra.mxu0 %v169
    %841 = vmatprep.subr.mxu0 0.0
    %842 = vmatpush1.msra.mxu0 0.0
    %843 = vmatprep.subr.mxu0 0.0
    %844 = vmatpush1.msra.mxu0 0.0
    %845 = vmatprep.subr.mxu0 0.0
    %846 = vmatpush1.msra.mxu0 0.0
    %847 = vmatprep.subr.mxu0 0.0
    %848 = vmatpush1.msra.mxu0 0.0
    %849 = vmatprep.subr.mxu0 0.0
    %850 = vmatpush1.msra.mxu0 0.0
    %851 = vmatprep.subr.mxu0 0.0
    %852 = vmatpush1.msra.mxu0 0.0
    %853 = vmatprep.subr.mxu0 0.0
    %854 = vmatpush1.msra.mxu0 0.0
    %855 = vmatprep.subr.mxu0 0.0
    %856 = vmatpush1.msra.mxu0 0.0
    %857 = vmatprep.subr.mxu0 0.0
    %858 = vmatpush1.msra.mxu0 0.0
    %859 = vmatprep.subr.mxu0 0.0
    %860 = vmatpush1.msra.mxu0 0.0
    %861 = vmatprep.subr.mxu0 0.0
    %862 = vmatpush1.msra.mxu0 0.0
    %863 = vmatprep.subr.mxu0 0.0
    %864 = vmatpush1.msra.mxu0 0.0
    %865 = vmatprep.subr.mxu0 0.0
    %866 = vmatpush1.msra.mxu0 0.0
    %867 = vmatprep.subr.mxu0 0.0
    %868 = vmatpush1.msra.mxu0 0.0
    %869 = vmatprep.subr.mxu0 0.0
    %870 = vmatpush1.msra.mxu0 0.0
    %871 = vmatprep.subr.mxu0 0.0
    %872 = vmatpush1.msra.mxu0 0.0
    %873 = vmatprep.subr.mxu0 0.0
    %874 = vmatpush1.msra.mxu0 0.0
    %875 = vmatprep.subr.mxu0 0.0
    %876 = vmatpush1.msra.mxu0 0.0
    %877 = vmatprep.subr.mxu0 0.0
    %878 = vmatpush1.msra.mxu0 0.0
    %879 = vmatprep.subr.mxu0 0.0
    %880 = vmatpush1.msra.mxu0 0.0
    %881 = vmatprep.subr.mxu0 0.0
    %882 = vmatpush1.msra.mxu0 0.0
    %883 = vmatprep.subr.mxu0 0.0
    %884 = vmatpush1.msra.mxu0 0.0
    %885 = vmatprep.subr.mxu0 0.0
    %886 = vmatpush1.msra.mxu0 0.0
    %887 = vmatprep.subr.mxu0 0.0
    %888 = vmatpush1.msra.mxu0 0.0
    %889 = vmatprep.subr.mxu0 0.0
    %890 = vmatpush1.msra.mxu0 0.0
    %891 = vmatprep.subr.mxu0 0.0
    %892 = vmatpush1.msra.mxu0 0.0
    %893 = vmatprep.subr.mxu0 0.0
    %894 = vmatpush1.msra.mxu0 0.0
    %895 = vmatprep.subr.mxu0 0.0
    %896 = vmatpush1.msra.mxu0 0.0
    %897 = vmatprep.mubr.f32.mxu0 0.0
    %898 = vmatmul.mubr.f32.gmra.mrb[0].mxu0 %v831
    %v899 = vpop.f32.mrb[0].mxu0
    %v900 = vadd.f32 %v78, %v899
    %v901 = vpop.f32.mrb[0].mxu0
    %902 = vdwg.mxu0
    %v904 = vrot.slane %v900, 2
    %v906 = vadd.f32 %v163, %v904
    %v907 = vxor.u32 %v906, 2147483648
    %v908 = vmul.f32 %v907, 1.442695
    %v909 = vpow.pop %v908
    %v910 = vadd.f32 %v909, 1.0
    %v911 = vrcp.pop %v910
    %v912 = vmul.f32 1.0, %v911
    %913 = vrot.lane.b32.xlu0 %v904, 64
    %v914 = vpop.permute.xlu0 %913
    %v916 = vmul.f32 %v912, %v914
    %918 = vrot.lane.b32.xlu0 %v916, 64
    %v919 = vpop.permute.xlu0 %918
    %v921 = vadd.f32 %v163, %v919
    %v922 = vtanh.pop %v921
    %v923 = vsub.f32 1.0, %v912
    %925 = vrot.lane.b32.xlu0 %v922, 96
    %v926 = vpop.permute.xlu0 %925
    %v928 = vmul.f32 %v923, %v926
    %v929 = vrot.slane %v821, 7
    %v931 = vmul.f32 %v912, %v929
    %v932 = vadd.f32 %v928, %v931
    %934 = vrot.lane.b32.xlu0 %v932, 96
    %v935 = vpop.permute.xlu0 %934
    %vm937 = vcmask 260102
    %938 = vst.msk [vmem:[#allocation2] sm:$0x40] %vm937, %v935
    %v939 = vrot.slane %v932, 6
    %940 = vrot.lane.b32.xlu0 %v939, 96
    %v941 = vpop.permute.xlu0 %940
    %v942 = vsel %vm170, %v941, 0
    %944 = vmatprep.subr.mxu0 0.0
    %945 = vmatpush1.msra.mxu0 %v166
    %946 = vmatprep.subr.mxu0 0.0
    %947 = vmatpush1.msra.mxu0 %v167
    %948 = vmatprep.subr.mxu0 0.0
    %949 = vmatpush1.msra.mxu0 %v168
    %950 = vmatprep.subr.mxu0 0.0
    %951 = vmatpush1.msra.mxu0 %v169
    %952 = vmatprep.subr.mxu0 0.0
    %953 = vmatpush1.msra.mxu0 0.0
    %954 = vmatprep.subr.mxu0 0.0
    %955 = vmatpush1.msra.mxu0 0.0
    %956 = vmatprep.subr.mxu0 0.0
    %957 = vmatpush1.msra.mxu0 0.0
    %958 = vmatprep.subr.mxu0 0.0
    %959 = vmatpush1.msra.mxu0 0.0
    %960 = vmatprep.subr.mxu0 0.0
    %961 = vmatpush1.msra.mxu0 0.0
    %962 = vmatprep.subr.mxu0 0.0
    %963 = vmatpush1.msra.mxu0 0.0
    %964 = vmatprep.subr.mxu0 0.0
    %965 = vmatpush1.msra.mxu0 0.0
    %966 = vmatprep.subr.mxu0 0.0
    %967 = vmatpush1.msra.mxu0 0.0
    %968 = vmatprep.subr.mxu0 0.0
    %969 = vmatpush1.msra.mxu0 0.0
    %970 = vmatprep.subr.mxu0 0.0
    %971 = vmatpush1.msra.mxu0 0.0
    %972 = vmatprep.subr.mxu0 0.0
    %973 = vmatpush1.msra.mxu0 0.0
    %974 = vmatprep.subr.mxu0 0.0
    %975 = vmatpush1.msra.mxu0 0.0
    %976 = vmatprep.subr.mxu0 0.0
    %977 = vmatpush1.msra.mxu0 0.0
    %978 = vmatprep.subr.mxu0 0.0
    %979 = vmatpush1.msra.mxu0 0.0
    %980 = vmatprep.subr.mxu0 0.0
    %981 = vmatpush1.msra.mxu0 0.0
    %982 = vmatprep.subr.mxu0 0.0
    %983 = vmatpush1.msra.mxu0 0.0
    %984 = vmatprep.subr.mxu0 0.0
    %985 = vmatpush1.msra.mxu0 0.0
    %986 = vmatprep.subr.mxu0 0.0
    %987 = vmatpush1.msra.mxu0 0.0
    %988 = vmatprep.subr.mxu0 0.0
    %989 = vmatpush1.msra.mxu0 0.0
    %990 = vmatprep.subr.mxu0 0.0
    %991 = vmatpush1.msra.mxu0 0.0
    %992 = vmatprep.subr.mxu0 0.0
    %993 = vmatpush1.msra.mxu0 0.0
    %994 = vmatprep.subr.mxu0 0.0
    %995 = vmatpush1.msra.mxu0 0.0
    %996 = vmatprep.subr.mxu0 0.0
    %997 = vmatpush1.msra.mxu0 0.0
    %998 = vmatprep.subr.mxu0 0.0
    %999 = vmatpush1.msra.mxu0 0.0
    %1000 = vmatprep.subr.mxu0 0.0
    %1001 = vmatpush1.msra.mxu0 0.0
    %1002 = vmatprep.subr.mxu0 0.0
    %1003 = vmatpush1.msra.mxu0 0.0
    %1004 = vmatprep.subr.mxu0 0.0
    %1005 = vmatpush1.msra.mxu0 0.0
    %1006 = vmatprep.subr.mxu0 0.0
    %1007 = vmatpush1.msra.mxu0 0.0
    %1008 = vmatprep.mubr.f32.mxu0 0.0
    %1009 = vmatmul.mubr.f32.gmra.mrb[0].mxu0 %v942
    %v1010 = vpop.f32.mrb[0].mxu0
    %v1011 = vadd.f32 %v78, %v1010
    %v1012 = vpop.f32.mrb[0].mxu0
    %1013 = vdwg.mxu0
    %v1015 = vrot.slane %v1011, 1
    %v1017 = vadd.f32 %v163, %v1015
    %v1018 = vxor.u32 %v1017, 2147483648
    %v1019 = vmul.f32 %v1018, 1.442695
    %v1020 = vpow.pop %v1019
    %v1021 = vadd.f32 %v1020, 1.0
    %v1022 = vrcp.pop %v1021
    %v1023 = vmul.f32 1.0, %v1022
    %1024 = vrot.lane.b32.xlu0 %v1015, 64
    %v1025 = vpop.permute.xlu0 %1024
    %v1027 = vmul.f32 %v1023, %v1025
    %1029 = vrot.lane.b32.xlu0 %v1027, 64
    %v1030 = vpop.permute.xlu0 %1029
    %v1032 = vadd.f32 %v163, %v1030
    %v1033 = vtanh.pop %v1032
    %v1034 = vsub.f32 1.0, %v1023
    %1036 = vrot.lane.b32.xlu0 %v1033, 96
    %v1037 = vpop.permute.xlu0 %1036
    %v1039 = vmul.f32 %v1034, %v1037
    %v1040 = vrot.slane %v932, 7
    %v1042 = vmul.f32 %v1023, %v1040
    %v1043 = vadd.f32 %v1039, %v1042
    %1045 = vrot.lane.b32.xlu0 %v1043, 96
    %v1046 = vpop.permute.xlu0 %1045
    %vm1048 = vcmask 261127
    %1049 = vst.msk [vmem:[#allocation2] sm:$0x80] %vm1048, %v1046
    %v1050 = vld [vmem:[#allocation2] sm:$0xff]
    %v1051 = vld [vmem:[#allocation9] sm:$0xff]
    %v1052 = vld [vmem:[#allocation9 + $0x8] sm:$0xff]
    %v1053 = vld [vmem:[#allocation9 + $0x10] sm:$0xff]
    %v1054 = vld [vmem:[#allocation9 + $0x18] sm:$0xff]
    %v1055 = vld [vmem:[%s5] sm:$0x1]
    %v1057 = vlaneseq
    %v1058 = vshrl.u32 %v1057, 7
    %v1059 = vsub.s32 0, %v1058
    %v1060 = vrot.slane %v1055, %v1059
    %v1063 = vsel %vm170, %v1050, 0
    %1065 = vmatprep.subr.mxu0 0.0
    %1066 = vmatpush1.msra.mxu0 %v1051
    %1067 = vmatprep.subr.mxu0 0.0
    %1068 = vmatpush1.msra.mxu0 %v1052
    %1069 = vmatprep.subr.mxu0 0.0
    %1070 = vmatpush1.msra.mxu0 %v1053
    %1071 = vmatprep.subr.mxu0 0.0
    %1072 = vmatpush1.msra.mxu0 %v1054
    %1073 = vmatprep.subr.mxu0 0.0
    %1074 = vmatpush1.msra.mxu0 0.0
    %1075 = vmatprep.subr.mxu0 0.0
    %1076 = vmatpush1.msra.mxu0 0.0
    %1077 = vmatprep.subr.mxu0 0.0
    %1078 = vmatpush1.msra.mxu0 0.0
    %1079 = vmatprep.subr.mxu0 0.0
    %1080 = vmatpush1.msra.mxu0 0.0
    %1081 = vmatprep.subr.mxu0 0.0
    %1082 = vmatpush1.msra.mxu0 0.0
    %1083 = vmatprep.subr.mxu0 0.0
    %1084 = vmatpush1.msra.mxu0 0.0
    %1085 = vmatprep.subr.mxu0 0.0
    %1086 = vmatpush1.msra.mxu0 0.0
    %1087 = vmatprep.subr.mxu0 0.0
    %1088 = vmatpush1.msra.mxu0 0.0
    %1089 = vmatprep.subr.mxu0 0.0
    %1090 = vmatpush1.msra.mxu0 0.0
    %1091 = vmatprep.subr.mxu0 0.0
    %1092 = vmatpush1.msra.mxu0 0.0
    %1093 = vmatprep.subr.mxu0 0.0
    %1094 = vmatpush1.msra.mxu0 0.0
    %1095 = vmatprep.subr.mxu0 0.0
    %1096 = vmatpush1.msra.mxu0 0.0
    %1097 = vmatprep.subr.mxu0 0.0
    %1098 = vmatpush1.msra.mxu0 0.0
    %1099 = vmatprep.subr.mxu0 0.0
    %1100 = vmatpush1.msra.mxu0 0.0
    %1101 = vmatprep.subr.mxu0 0.0
    %1102 = vmatpush1.msra.mxu0 0.0
    %1103 = vmatprep.subr.mxu0 0.0
    %1104 = vmatpush1.msra.mxu0 0.0
    %1105 = vmatprep.subr.mxu0 0.0
    %1106 = vmatpush1.msra.mxu0 0.0
    %1107 = vmatprep.subr.mxu0 0.0
    %1108 = vmatpush1.msra.mxu0 0.0
    %1109 = vmatprep.subr.mxu0 0.0
    %1110 = vmatpush1.msra.mxu0 0.0
    %1111 = vmatprep.subr.mxu0 0.0
    %1112 = vmatpush1.msra.mxu0 0.0
    %1113 = vmatprep.subr.mxu0 0.0
    %1114 = vmatpush1.msra.mxu0 0.0
    %1115 = vmatprep.subr.mxu0 0.0
    %1116 = vmatpush1.msra.mxu0 0.0
    %1117 = vmatprep.subr.mxu0 0.0
    %1118 = vmatpush1.msra.mxu0 0.0
    %1119 = vmatprep.subr.mxu0 0.0
    %1120 = vmatpush1.msra.mxu0 0.0
    %1121 = vmatprep.subr.mxu0 0.0
    %1122 = vmatpush1.msra.mxu0 0.0
    %1123 = vmatprep.subr.mxu0 0.0
    %1124 = vmatpush1.msra.mxu0 0.0
    %1125 = vmatprep.subr.mxu0 0.0
    %1126 = vmatpush1.msra.mxu0 0.0
    %1127 = vmatprep.subr.mxu0 0.0
    %1128 = vmatpush1.msra.mxu0 0.0
    %1129 = vmatprep.mubr.f32.mxu0 0.0
    %1130 = vmatmul.mubr.f32.gmra.mrb[0].mxu0 %v1063
    %v1131 = vpop.f32.mrb[0].mxu0
    %v1132 = vadd.f32 %v1060, %v1131
    %v1133 = vpop.f32.mrb[0].mxu0
    %1134 = vdwg.mxu0
    %1135 = vst.msk [vmem:[#allocation11] sm:$0xff] %vm170, %v1132
    // Predicated region
    $region42: #{tpu_custom_call.1} parent=1 // pred_check
      _
    $region43: #{tpu_custom_call.1} parent=1 // pred_check_branch
      %1137 = sbr.rel (0) target = $region45
    $region44: #{tpu_custom_call.1} parent=1 // pred_region
      %s1139 = ssub.s32 128, 128
      %1140 = vsyncadd [#allocation5], %s1139
      %s1142 = sshll.u32 [#allocation11], 4
      %s1143 = int_to_ptr.vmem [resolvable:$true] %s1142
      %1145 = dma.vmem_to_hbm [thread:$0]  %s1143, 128, %s6, [#allocation5]
    $region45: #{tpu_custom_call.1} parent=1 // pred_fallthru
      _
    // Predicated region
    $region46: #{tpu_custom_call.1} parent=1 // pred_check
      _
    $region47: #{tpu_custom_call.1} parent=1 // pred_check_branch
      %1147 = sbr.rel (0) target = $region49
    $region48: #{tpu_custom_call.1} parent=1 // pred_region
      %1148 = dma.done [#allocation5], 128
    $region49: #{tpu_custom_call.1} parent=1 // pred_fallthru
      _
    %1149 = vsyncpa [#allocation4], 1
    %1150 = vsyncpa [#allocation7], 1
    %1151 = vsyncpa [#allocation10], 1
    %1152 = vsyncpa [#allocation5], 1

</llo_original>
